<compile_context>
chip_gen: v5e
topology: v5e:2x2
jax: 0.10.0
libtpu: 0.0.40
codegen_flags: <defaults>
</compile_context>

<pallas_src>
import math
import functools

import jax
import jax.numpy as jnp
from jax.experimental import pallas as pl
from jax.experimental.pallas import tpu as pltpu


def make_pe(max_len: int, d_model: int, dtype=jnp.float32):
    """Sinusoidal positional-encoding table, shape (max_len, d_model).

    Equivalent to the (max_len, 1, d_model) buffer in the PyTorch module with
    the singleton axis squeezed (it exists only for broadcasting).
    """
    position = jnp.arange(max_len, dtype=jnp.float32)[:, None]          # (L, 1)
    div_term = jnp.exp(
        jnp.arange(0, d_model, 2, dtype=jnp.float32) * (-math.log(10000.0) / d_model)
    )                                                                   # (D/2,)
    pe = jnp.zeros((max_len, d_model), dtype=jnp.float32)
    pe = pe.at[:, 0::2].set(jnp.sin(position * div_term))
    pe = pe.at[:, 1::2].set(jnp.cos(position * div_term))
    return pe.astype(dtype)


def _pe_add_kernel(x_ref, pe_ref, o_ref):
    """Eval path: y = x + pe (one (tS, D) tile per grid step)."""
    o_ref[...] = (x_ref[...] + pe_ref[...]).astype(o_ref.dtype)


def _pe_add_dropout_kernel(x_ref, pe_ref, keep_ref, o_ref, *, scale: float):
    """Train path: y = inverted_dropout(x + pe) using a precomputed keep mask."""
    y = x_ref[...] + pe_ref[...]                       # (tS, D), stays in x.dtype
    s = jnp.asarray(scale, dtype=y.dtype)              # no silent f32 upcast for bf16
    y = jnp.where(keep_ref[...] != 0, y * s, jnp.zeros_like(y))
    o_ref[...] = y.astype(o_ref.dtype)


def _choose_tile_s(S: int, D: int, itemsize: int,
                   budget_bytes: int = 16 * 1024 * 1024) -> int:
    """Largest S-tile whose double-buffered x/pe/out (+int8 mask) tiles fit the budget.

    Budget is conservative so the same tile works on v7x (64 MiB VMEM/TC) as
    well as v5e/v6e.  Rows are rounded to a multiple of 32 (int8 sublane tile).
    """
    bytes_per_row = 2 * D * (3 * itemsize + 1)         # 2x buffering, 3 big arrays + mask
    rows = budget_bytes // max(bytes_per_row, 1)
    if rows >= S:
        return S
    return int(max(32, min(1024, (rows // 32) * 32)))


def positional_encoding_forward(x, pe, *, p: float = 0.1, dropout_key=None,
                                tile_s: int | None = None,
                                vmem_limit_bytes: int = 48 * 1024 * 1024):
    """x: (B, S, D); pe: (max_len, D).  Dropout applied iff dropout_key is given and p > 0."""
    B, S, D = x.shape
    assert pe.shape[0] >= S and pe.shape[1] == D
    p = float(p)

    if dropout_key is not None and p >= 1.0:
        # torch.nn.Dropout(p=1.0) zeroes everything in training mode.
        return jnp.zeros_like(x)

    pe_slice = pe[:S].astype(x.dtype)                  # (S, D) static slice (glue)

    tS = tile_s if tile_s is not None else _choose_tile_s(S, D, x.dtype.itemsize)
    tS = int(min(tS, S))
    grid = (pl.cdiv(S, tS), B)                         # batch innermost → pe stays resident

    x_spec = pl.BlockSpec((None, tS, D), lambda s, b: (b, s, 0))
    pe_spec = pl.BlockSpec((tS, D), lambda s, b: (s, 0))      # b-invariant → no re-fetch
    out_spec = pl.BlockSpec((None, tS, D), lambda s, b: (b, s, 0))
    out_shape = jax.ShapeDtypeStruct((B, S, D), x.dtype)
    cparams = pltpu.CompilerParams(
        dimension_semantics=("parallel", "arbitrary"),
        vmem_limit_bytes=vmem_limit_bytes,
    )

    if dropout_key is None or p <= 0.0:
        return pl.pallas_call(
            _pe_add_kernel,
            out_shape=out_shape,
            grid_spec=pltpu.PrefetchScalarGridSpec(
                num_scalar_prefetch=0,
                grid=grid,
                in_specs=[x_spec, pe_spec],
                out_specs=out_spec,
            ),
            compiler_params=cparams,
        )(x, pe_slice)

    # Training path: inverted dropout (matches torch.nn.Dropout in training mode).
    # The Bernoulli draw is glue (1 byte/element of extra HBM traffic); the
    # select + rescale runs in-kernel.
    # TODO(synk): switch to in-kernel pltpu.prng_random_bits once the target
    # runtime can lower the TPU PRNG primitives (removes the mask DMA entirely).
    keep = jax.random.bernoulli(dropout_key, 1.0 - p, (B, S, D)).astype(jnp.int8)
    keep_spec = pl.BlockSpec((None, tS, D), lambda s, b: (b, s, 0))
    kernel = functools.partial(_pe_add_dropout_kernel, scale=1.0 / (1.0 - p))
    return pl.pallas_call(
        kernel,
        out_shape=out_shape,
        grid_spec=pltpu.PrefetchScalarGridSpec(
            num_scalar_prefetch=0,
            grid=grid,
            in_specs=[x_spec, pe_spec, keep_spec],
            out_specs=out_spec,
        ),
        compiler_params=cparams,
    )(x, pe_slice, keep)


if __name__ == "__main__":
    B, S, D = 2, 16, 128        # small shapes; D multiple of 128 keeps stores lane-dense
    MAX_LEN = 64                # small stand-in for max_len=5000
    P = 0.1

    root = jax.random.PRNGKey(0)
    kx, kd = jax.random.split(root)
    x = jax.random.normal(kx, (B, S, D), dtype=jnp.float32)
    pe = make_pe(MAX_LEN, D)
    ref = x + pe[None, :S, :]

    # Eval-style pass (no dropout); force tile_s=8 to exercise the multi-tile
    # (S_tiles=2, B=2) grid path even at these tiny shapes.
    y_eval = positional_encoding_forward(x, pe, p=P, dropout_key=None, tile_s=8)
    jax.block_until_ready(y_eval)
    assert y_eval.shape == (B, S, D)
    assert jnp.allclose(y_eval, ref, atol=1e-6), "positional-encoding add mismatch"

    # Training-style pass with dropout p=0.1 (mask reproducible from the key).
    y_train = positional_encoding_forward(x, pe, p=P, dropout_key=kd)
    jax.block_until_ready(y_train)
    keep = jax.random.bernoulli(kd, 1.0 - P, (B, S, D))
    expected = jnp.where(keep, ref / (1.0 - P), 0.0)
    assert y_train.shape == (B, S, D)
    assert jnp.allclose(y_train, expected, atol=1e-5), "dropout path mismatch"
    assert bool(jnp.all(jnp.isfinite(y_train)))

    print("KERNEL_OK")
</pallas_src>

<mosaic_0001>
module attributes {stable_mosaic.version = 11 : i64} {
  func.func @_pe_add_kernel(%arg0: i32, %arg1: i32, %arg2: memref<1x8x128xf32, #tpu.memory_space<vmem>>, %arg3: memref<8x128xf32, #tpu.memory_space<vmem>>, %arg4: memref<1x8x128xf32, #tpu.memory_space<vmem>>) attributes {dimension_semantics = [#tpu.dimension_semantics<parallel>, #tpu.dimension_semantics<arbitrary>], iteration_bounds = array<i64: 2, 2>, scalar_prefetch = 0 : i64, scratch_operands = 0 : i64, tpu.core_type = #tpu.core_type<tc>, window_params = [{transform_indices = @transform_0, window_bounds = array<i64: 1, 8, 128>}, {transform_indices = @transform_1, window_bounds = array<i64: 8, 128>}, {transform_indices = @transform_2, window_bounds = array<i64: 1, 8, 128>}]} {
    %c0 = arith.constant 0 : index
    %c0_0 = arith.constant 0 : index
    %c0_1 = arith.constant 0 : index
    %0 = vector.load %arg2[%c0, %c0_0, %c0_1] : memref<1x8x128xf32, #tpu.memory_space<vmem>>, vector<1x8x128xf32>
    %1 = vector.shape_cast %0 : vector<1x8x128xf32> to vector<8x128xf32>
    %c0_2 = arith.constant 0 : index
    %c0_3 = arith.constant 0 : index
    %2 = vector.load %arg3[%c0_2, %c0_3] : memref<8x128xf32, #tpu.memory_space<vmem>>, vector<8x128xf32>
    %3 = arith.addf %1, %2 : vector<8x128xf32>
    %c0_4 = arith.constant 0 : index
    %c0_5 = arith.constant 0 : index
    %c0_6 = arith.constant 0 : index
    %4 = vector.load %arg4[%c0_4, %c0_5, %c0_6] : memref<1x8x128xf32, #tpu.memory_space<vmem>>, vector<1x8x128xf32>
    %5 = vector.shape_cast %4 : vector<1x8x128xf32> to vector<8x128xf32>
    %6 = vector.shape_cast %3 : vector<8x128xf32> to vector<1x8x128xf32>
    tpu.vector_store %arg4[%c0_4, %c0_5, %c0_6], %6 {strides = array<i32>} : memref<1x8x128xf32, #tpu.memory_space<vmem>>, vector<1x8x128xf32>,
    return
  }
  func.func @transform_0(%arg0: i32, %arg1: i32) -> (i32, i32, i32) {
    %c0_i32 = arith.constant 0 : i32
    %c0_i32_0 = arith.constant 0 : i32
    return %arg1, %arg0, %c0_i32 : i32, i32, i32
  }
  func.func @transform_1(%arg0: i32, %arg1: i32) -> (i32, i32) {
    %c0_i32 = arith.constant 0 : i32
    %c0_i32_0 = arith.constant 0 : i32
    return %arg0, %c0_i32 : i32, i32
  }
  func.func @transform_2(%arg0: i32, %arg1: i32) -> (i32, i32, i32) {
    %c0_i32 = arith.constant 0 : i32
    %c0_i32_0 = arith.constant 0 : i32
    return %arg1, %arg0, %c0_i32 : i32, i32, i32
  }
}

</mosaic_0001>

<llo_original>
// kernel: tpu_custom_call.1
$region0: #{tpu_custom_call.1}
  #allocation0 [shape = 'u32[]', space=smem, size = 0x4, offset = 0x4, fixed_abs, tag = 'smem constant byte address 0x4 - core index']
  #allocation1 [shape = 'u32[72,128]{1,0:T(1,128)}', space=vmem, size = 0x9000, scoped, tag = 'internal scratch']
  %s0 = inlined_call_operand.hbm [shape: f32[2,16,128], index: 0, kind: input, shape index: {}]
  %s1 = inlined_call_operand.hbm [shape: f32[16,128], index: 1, kind: input, shape index: {}]
  %s2 = inlined_call_operand.hbm [shape: f32[2,16,128], index: 2, kind: output, shape index: {}]
  %s3 = sld [smem:[#allocation0]]
  $region49: #{tpu_custom_call.1} parent=0
    _
  %s5 = ssub.s32 1, %s3
  %s6 = scalar_select 0, %s5, %s3
  $region1: #{tpu_custom_call.1} parent=0
    #allocation2 [shape = 'u8[8192]{0}', space=vmem, size = 0x2000, scoped, tag = 'input window, operand 0']
    #allocation3 [shape = 's32[2]{0}', space=sflag, size = 0x8, scoped, tag = 'scoped memory for tpu_custom_call.1']
    #allocation4 [shape = 's32[2]{0}', space=sflag, size = 0x8, scoped, tag = 'scoped memory for tpu_custom_call.1']
    #allocation5 [shape = 'u8[8192]{0}', space=vmem, size = 0x2000, scoped, tag = 'input window, operand 1']
    #allocation6 [shape = 's32[2]{0}', space=sflag, size = 0x8, scoped, tag = 'scoped memory for tpu_custom_call.1']
    #allocation7 [shape = 'u8[8192]{0}', space=vmem, size = 0x2000, scoped, tag = 'output window, operand 0']
    %7 = vsyncpa [#allocation3], 0
    %s8 = scalar_lea.sflag [#allocation3], 1
    %9 = vsyncpa %s8, 0
    %10 = vsyncpa [#allocation6], 0
    %s11 = scalar_lea.sflag [#allocation6], 1
    %12 = vsyncpa %s11, 0
    %13 = vsyncpa [#allocation4], 0
    %s14 = scalar_lea.sflag [#allocation4], 1
    %15 = vsyncpa %s14, 0
    loop: start=0, step=1, limit=6
    $region2: #{tpu_custom_call.1} parent=1 // loop_pre_header
      _
    $region3: #{tpu_custom_call.1} parent=1 // loop_header
      %s17 = sphi 0, %s21
      %p18 = scmp.ge.s32.totalorder %s17, 6
      %s24 = sphi 0, %s36
      %s25 = sphi 0, %s32
      %s26 = sphi 0, %s24
      %s27 = sphi 0, %s25
      %s28 = sphi 0, %s26
      %s29 = sphi 0, %s27
      %s41 = sphi 0, %s43
      %s44 = sphi 0, %s41
      %s45 = sphi 0, %s44
      %s61 = sphi 0, %s45
      %s67 = sphi 0, %s69
      %s70 = sphi 0, %s67
      %s71 = sphi 0, %s70
      %s87 = sphi 0, %s71
      %s95 = sphi 0, %s97
      %s98 = sphi 0, %s95
      %s99 = sphi 0, %s98
      %s115 = sphi 0, %s99
    $region4: #{tpu_custom_call.1} parent=1 // loop_header_branch
      %20 = sbr.rel (%p18) target = $region8
    $region5: #{tpu_custom_call.1} parent=1 // loop_body
      %s22 = ssub.s32 %s17, 1
      %s23 = ssub.s32 %s17, 2
      %s30 = sadd.s32 1, %s25
      %p31 = scmp.ge.s32.totalorder %s30, 2
      %s32 = scalar_select %p31, 0, %s30
      %s33 = sadd.s32 1, %s24
      %s34 = scalar_select %p31, %s33, %s24
      %p35 = scmp.ge.s32.totalorder %s34, 2
      %s36 = scalar_select %p35, 0, %s34
      %s37 = ssub.s32 %s25, %s32
      %s38 = ssub.s32 %s24, %s36
      %s39 = sor.u32 %s37, %s38
      %p40 = scmp.eq.s32.totalorder %s39, 0
      %s42 = sadd.s32 %s41, 1
      %s43 = scalar_select %p40, %s41, %s42
      %p46 = pneg %p40
      %p47 = scmp.eq.s32.totalorder %s17, 3
      %p48 = por %p46, %p47
      %p49 = scmp.ne.s32.totalorder %s41, %s44
      %p50 = scmp.eq.s32.totalorder %s17, 0
      %p51 = por %p49, %p50
      %p52 = scmp.ne.s32.totalorder %s41, %s44
      %p53 = scmp.eq.s32.totalorder %s22, 3
      %p54 = por %p52, %p53
      %p55 = scmp.ne.s32.totalorder %s44, %s45
      %p56 = scmp.eq.s32.totalorder %s22, 0
      %p57 = por %p55, %p56
      %p58 = scmp.ne.s32.totalorder %s44, %s45
      %p59 = scmp.eq.s32.totalorder %s23, 3
      %p60 = por %p58, %p59
      %p62 = scmp.ne.s32.totalorder %s45, %s61
      %p63 = scmp.eq.s32.totalorder %s23, 0
      %p64 = por %p62, %p63
      %s65 = ssub.s32 %s24, %s36
      %p66 = scmp.eq.s32.totalorder %s65, 0
      %s68 = sadd.s32 %s67, 1
      %s69 = scalar_select %p66, %s67, %s68
      %p72 = pneg %p66
      %p73 = scmp.eq.s32.totalorder %s17, 3
      %p74 = por %p72, %p73
      %p75 = scmp.ne.s32.totalorder %s67, %s70
      %p76 = scmp.eq.s32.totalorder %s17, 0
      %p77 = por %p75, %p76
      %p78 = scmp.ne.s32.totalorder %s67, %s70
      %p79 = scmp.eq.s32.totalorder %s22, 3
      %p80 = por %p78, %p79
      %p81 = scmp.ne.s32.totalorder %s70, %s71
      %p82 = scmp.eq.s32.totalorder %s22, 0
      %p83 = por %p81, %p82
      %p84 = scmp.ne.s32.totalorder %s70, %s71
      %p85 = scmp.eq.s32.totalorder %s23, 3
      %p86 = por %p84, %p85
      %p88 = scmp.ne.s32.totalorder %s71, %s87
      %p89 = scmp.eq.s32.totalorder %s23, 0
      %p90 = por %p88, %p89
      %s91 = ssub.s32 %s25, %s32
      %s92 = ssub.s32 %s24, %s36
      %s93 = sor.u32 %s91, %s92
      %p94 = scmp.eq.s32.totalorder %s93, 0
      %s96 = sadd.s32 %s95, 1
      %s97 = scalar_select %p94, %s95, %s96
      %p100 = pneg %p94
      %p101 = scmp.eq.s32.totalorder %s17, 3
      %p102 = por %p100, %p101
      %p103 = scmp.ne.s32.totalorder %s95, %s98
      %p104 = scmp.eq.s32.totalorder %s17, 0
      %p105 = por %p103, %p104
      %p106 = scmp.ne.s32.totalorder %s95, %s98
      %p107 = scmp.eq.s32.totalorder %s22, 3
      %p108 = por %p106, %p107
      %p109 = scmp.ne.s32.totalorder %s98, %s99
      %p110 = scmp.eq.s32.totalorder %s22, 0
      %p111 = por %p109, %p110
      %p112 = scmp.ne.s32.totalorder %s98, %s99
      %p113 = scmp.eq.s32.totalorder %s23, 3
      %p114 = por %p112, %p113
      %p116 = scmp.ne.s32.totalorder %s99, %s115
      %p117 = scmp.eq.s32.totalorder %s23, 0
      %p118 = por %p116, %p117
      %p119 = scmp.le.s32.totalorder 1, %s17
      %p120 = scmp.lt.s32.totalorder %s17, 5
      %p121 = pnand %p119, %p120
      %p122 = pneg %p121
      // Predicated region
      $region9: #{tpu_custom_call.1} parent=5 // pred_check
        _
      $region10: #{tpu_custom_call.1} parent=5 // pred_check_branch
        %124 = sbr.rel (%p121) target = $region12
      $region11: #{tpu_custom_call.1} parent=5 // pred_region
        %s125 = ssub.s32 %s17, 1
      $region12: #{tpu_custom_call.1} parent=5 // pred_fallthru
        _
      %p126 = scmp.lt.s32.totalorder %s17, 4
      // Predicated region
      $region13: #{tpu_custom_call.1} parent=5 // pred_check
        %p127 = pneg %p126
      $region14: #{tpu_custom_call.1} parent=5 // pred_check_branch
        %129 = sbr.rel (%p127) target = $region16
      $region15: #{tpu_custom_call.1} parent=5 // pred_region
        // Predicated region
        $region17: #{tpu_custom_call.1} parent=15 // pred_check
          %p130 = pneg %p51
        $region18: #{tpu_custom_call.1} parent=15 // pred_check_branch
          %132 = sbr.rel (%p130) target = $region20
        $region19: #{tpu_custom_call.1} parent=15 // pred_region
          %s133 = sand.u32 %s41, 1
          %s134 = scalar_lea.sflag [#allocation3], %s133
          %s135 = sand.u32 %s41, 1
          %s136 = smul.addr %s135, 8
          %s137 = scalar_lea.vmem [#allocation2], %s136
          %139 = vsyncadd %s134, 0
          %s140 = smul.addr %s25, 2
          %s141 = sadd.s32 %s24, %s140
          %s142 = smul.addr %s141, 8
          %s143 = scalar_lea.hbm %s0, %s142
          %s145 = sshll.u32 %s143, 4
          %s146 = int_to_ptr.hbm [resolvable:$true] %s145
          %s147 = sshll.u32 %s137, 4
          %s148 = int_to_ptr.vmem [resolvable:$true] %s147
          %150 = dma.hbm_to_vmem [thread:$0]  %s146, 128, %s148, %s134
        $region20: #{tpu_custom_call.1} parent=15 // pred_fallthru
          _
        // Predicated region
        $region21: #{tpu_custom_call.1} parent=15 // pred_check
          %p151 = pneg %p77
        $region22: #{tpu_custom_call.1} parent=15 // pred_check_branch
          %153 = sbr.rel (%p151) target = $region24
        $region23: #{tpu_custom_call.1} parent=15 // pred_region
          %s154 = sand.u32 %s67, 1
          %s155 = scalar_lea.sflag [#allocation6], %s154
          %s156 = sand.u32 %s67, 1
          %s157 = smul.addr %s156, 8
          %s158 = scalar_lea.vmem [#allocation5], %s157
          %160 = vsyncadd %s155, 0
          %s161 = smul.addr %s24, 8
          %s162 = scalar_lea.hbm %s1, %s161
          %s164 = sshll.u32 %s162, 4
          %s165 = int_to_ptr.hbm [resolvable:$true] %s164
          %s166 = sshll.u32 %s158, 4
          %s167 = int_to_ptr.vmem [resolvable:$true] %s166
          %169 = dma.hbm_to_vmem [thread:$0]  %s165, 128, %s167, %s155
        $region24: #{tpu_custom_call.1} parent=15 // pred_fallthru
          _
      $region16: #{tpu_custom_call.1} parent=5 // pred_fallthru
        _
      %p170 = scmp.le.s32.totalorder 1, %s17
      %p171 = scmp.lt.s32.totalorder %s17, 5
      %p172 = pnand %p170, %p171
      %p173 = pneg %p172
      // Predicated region
      $region25: #{tpu_custom_call.1} parent=5 // pred_check
        _
      $region26: #{tpu_custom_call.1} parent=5 // pred_check_branch
        %175 = sbr.rel (%p172) target = $region28
      $region27: #{tpu_custom_call.1} parent=5 // pred_region
        %s176 = ssub.s32 %s17, 1
        %s177 = sand.u32 %s44, 1
        %s178 = scalar_lea.sflag [#allocation3], %s177
        %s179 = sand.u32 %s44, 1
        %s180 = smul.addr %s179, 8
        %s181 = scalar_lea.vmem [#allocation2], %s180
        // Predicated region
        $region29: #{tpu_custom_call.1} parent=27 // pred_check
          %p182 = pneg %p57
        $region30: #{tpu_custom_call.1} parent=27 // pred_check_branch
          %184 = sbr.rel (%p182) target = $region32
        $region31: #{tpu_custom_call.1} parent=27 // pred_region
          %186 = dma.done %s178, 128
        $region32: #{tpu_custom_call.1} parent=27 // pred_fallthru
          _
        %s187 = sand.u32 %s70, 1
        %s188 = scalar_lea.sflag [#allocation6], %s187
        %s189 = sand.u32 %s70, 1
        %s190 = smul.addr %s189, 8
        %s191 = scalar_lea.vmem [#allocation5], %s190
        // Predicated region
        $region33: #{tpu_custom_call.1} parent=27 // pred_check
          %p192 = pneg %p83
        $region34: #{tpu_custom_call.1} parent=27 // pred_check_branch
          %194 = sbr.rel (%p192) target = $region36
        $region35: #{tpu_custom_call.1} parent=27 // pred_region
          %196 = dma.done %s188, 128
        $region36: #{tpu_custom_call.1} parent=27 // pred_fallthru
          _
        %s197 = sand.u32 %s44, 1
        %s198 = scalar_lea.sflag [#allocation3], %s197
        %s199 = sand.u32 %s44, 1
        %s200 = smul.addr %s199, 8
        %s201 = scalar_lea.vmem [#allocation2], %s200
        %p202 = pneg %p57
        %p203 = pneg %p54
        %s204 = sand.u32 %s70, 1
        %s205 = scalar_lea.sflag [#allocation6], %s204
        %s206 = sand.u32 %s70, 1
        %s207 = smul.addr %s206, 8
        %s208 = scalar_lea.vmem [#allocation5], %s207
        %p209 = pneg %p83
        %p210 = pneg %p80
        %p211 = pneg %p111
        %p212 = pneg %p108
        %s213 = sand.u32 %s98, 1
        %s214 = scalar_lea.sflag [#allocation4], %s213
        %s215 = sand.u32 %s98, 1
        %s216 = smul.addr %s215, 8
        %s217 = scalar_lea.vmem [#allocation7], %s216
        %v218 = vld [vmem:[%s181] sm:$0xff]
        %v219 = vld [vmem:[%s191] sm:$0xff]
        %v220 = vadd.f32 %v218, %v219
        %221 = vst [vmem:[%s217] sm:$0xff] %v220
        %s222 = sand.u32 %s98, 1
        %s223 = scalar_lea.sflag [#allocation4], %s222
        %s224 = sand.u32 %s98, 1
        %s225 = smul.addr %s224, 8
        %s226 = scalar_lea.vmem [#allocation7], %s225
        // Predicated region
        $region37: #{tpu_custom_call.1} parent=27 // pred_check
          %p227 = pneg %p108
        $region38: #{tpu_custom_call.1} parent=27 // pred_check_branch
          %229 = sbr.rel (%p227) target = $region40
        $region39: #{tpu_custom_call.1} parent=27 // pred_region
          %231 = vsyncadd %s223, 0
          %s232 = smul.addr %s27, 2
          %s233 = sadd.s32 %s26, %s232
          %s234 = smul.addr %s233, 8
          %s235 = scalar_lea.hbm %s2, %s234
          %s237 = sshll.u32 %s226, 4
          %s238 = int_to_ptr.vmem [resolvable:$true] %s237
          %s239 = sshll.u32 %s235, 4
          %s240 = int_to_ptr.hbm [resolvable:$true] %s239
          %242 = dma.vmem_to_hbm [thread:$0]  %s238, 128, %s240, %s223
        $region40: #{tpu_custom_call.1} parent=27 // pred_fallthru
          _
      $region28: #{tpu_custom_call.1} parent=5 // pred_fallthru
        _
      %p243 = scmp.le.s32.totalorder 2, %s17
      // Predicated region
      $region41: #{tpu_custom_call.1} parent=5 // pred_check
        %p244 = pneg %p243
      $region42: #{tpu_custom_call.1} parent=5 // pred_check_branch
        %246 = sbr.rel (%p244) target = $region44
      $region43: #{tpu_custom_call.1} parent=5 // pred_region
        %s247 = ssub.s32 %s17, 2
        // Predicated region
        $region45: #{tpu_custom_call.1} parent=43 // pred_check
          %p248 = pneg %p114
        $region46: #{tpu_custom_call.1} parent=43 // pred_check_branch
          %250 = sbr.rel (%p248) target = $region48
        $region47: #{tpu_custom_call.1} parent=43 // pred_region
          %s251 = sand.u32 %s99, 1
          %s252 = scalar_lea.sflag [#allocation4], %s251
          %s253 = sand.u32 %s99, 1
          %s254 = smul.addr %s253, 8
          %s255 = scalar_lea.vmem [#allocation7], %s254
          %257 = dma.done %s252, 128
        $region48: #{tpu_custom_call.1} parent=43 // pred_fallthru
          _
      $region44: #{tpu_custom_call.1} parent=5 // pred_fallthru
        _
    $region6: #{tpu_custom_call.1} parent=1 // loop_footer
      %s21 = sadd.s32 1, %s17
    $region7: #{tpu_custom_call.1} parent=1 // loop_footer_branch
      %16 = sbr.rel target = $region3
    $region8: #{tpu_custom_call.1} parent=1 // loop_exit
      _
    %258 = vsyncpa [#allocation3], 1
    %s259 = scalar_lea.sflag [#allocation3], 1
    %260 = vsyncpa %s259, 1
    %261 = vsyncpa [#allocation6], 1
    %s262 = scalar_lea.sflag [#allocation6], 1
    %263 = vsyncpa %s262, 1
    %264 = vsyncpa [#allocation4], 1
    %s265 = scalar_lea.sflag [#allocation4], 1
    %266 = vsyncpa %s265, 1

</llo_original>
